<compile_context>
chip_gen: v7x
topology: tpu7x:2x2x1
jax: 0.10.0
libtpu: 0.0.40
codegen_flags: <defaults>
</compile_context>

<pallas_src>
import functools

import jax
import jax.numpy as jnp
from jax.experimental import pallas as pl
from jax.experimental.pallas import tpu as pltpu


def _sdpa_flash_kernel(q_ref, k_ref, v_ref, o_ref,
                       qs_ref, m_ref, l_ref, acc_ref,
                       *, inv_temperature, kv_len, block_k, kv_is_padded):
    # q_ref: (Bb, tq, Dp), k_ref: (Bb, tk, Dp), v_ref: (Bb, tk, Dvp)
    # o_ref: (Bb, tq, Dvp)
    # qs_ref: (Bb, tq, Dp) input-dtype scratch (pre-scaled q, resident over kv)
    # m_ref, l_ref: (Bb, tq, 1) f32 ; acc_ref: (Bb, tq, Dvp) f32
    kv_idx = pl.program_id(2)

    @pl.when(kv_idx == 0)
    def _init():
        # Scale q once per q-tile (not once per kv step).
        qs_ref[...] = q_ref[...] * inv_temperature
        m_ref[...] = jnp.full_like(m_ref, -jnp.inf)
        l_ref[...] = jnp.zeros_like(l_ref)
        acc_ref[...] = jnp.zeros_like(acc_ref)

    q = qs_ref[...]
    k = k_ref[...]
    v = v_ref[...]

    # Scores tile: contract the D axes directly; f32 accumulation on the MXU.
    s = jnp.einsum("bqd,bkd->bqk", q, k,
                   preferred_element_type=jnp.float32)  # (Bb, tq, tk) f32

    if kv_is_padded:
        # Mask padded KV columns (only the last kv tile can be partial).
        col = kv_idx * block_k + jax.lax.broadcasted_iota(jnp.int32, s.shape, 2)
        s = jnp.where(col < kv_len, s, -jnp.inf)

    # Online softmax update (unnormalized accumulation).
    m_prev = m_ref[...]
    m_new = jnp.maximum(m_prev, jnp.max(s, axis=-1, keepdims=True))
    alpha = jnp.exp(m_prev - m_new)
    p = jnp.exp(s - m_new)

    l_ref[...] = alpha * l_ref[...] + jnp.sum(p, axis=-1, keepdims=True)
    acc_ref[...] = alpha * acc_ref[...] + jnp.einsum(
        "bqk,bkd->bqd", p.astype(v.dtype), v,
        preferred_element_type=jnp.float32)
    m_ref[...] = m_new

    @pl.when(kv_idx == pl.num_programs(2) - 1)
    def _finalize():
        # l is only (Bb, tq, 1): exact reciprocal is essentially free and
        # removes the ~1e-3 error of the approximate one.
        inv_l = pl.reciprocal(l_ref[...], approx=False)
        o_ref[...] = (acc_ref[...] * inv_l).astype(o_ref.dtype)


def _cdiv(a, b):
    return (a + b - 1) // b


def _round_up(x, m):
    return _cdiv(x, m) * m


def _min_sublane(dtype):
    # f32 -> 8, bf16 -> 16, int8/fp8 -> 32 (sub-32-bit dtypes pack sublanes).
    return {4: 8, 2: 16, 1: 32}.get(jnp.dtype(dtype).itemsize, 8)


def _pick_batch_block(batch, num_q_tiles, tq, target_rows=512):
    """Bb only amortizes per-grid-step overhead; keep >=2 parallel programs."""
    if num_q_tiles > 1 or batch == 1:
        return 1
    cap = max(1, target_rows // max(tq, 1))
    cap = min(cap, max(1, batch // 2))  # leave >= 2 programs on the b axis (v7x)
    bb = 1
    for d in range(1, min(batch, cap) + 1):
        if batch % d == 0:
            bb = d
    return bb


def _pad_to(x, shape):
    pads = [(0, t - s) for s, t in zip(x.shape, shape)]
    if any(p[1] for p in pads):
        x = jnp.pad(x, pads)
    return x


def scaled_dot_product_attention(q, k, v, temperature,
                                 *, target_tq=512, target_tk=512):
    """q: (B, Lq, D), k: (B, Lk, D), v: (B, Lk, Dv) -> (B, Lq, Dv)."""
    B, Lq, D = q.shape
    Bk, Lk, Dk = k.shape
    Bv, Lkv, Dv = v.shape
    assert B == Bk == Bv and D == Dk and Lk == Lkv

    dtype = q.dtype
    itemsize = jnp.dtype(dtype).itemsize
    sublane = _min_sublane(dtype)

    # --- Tile selection -----------------------------------------------------
    # q tile: grow toward target_tq (K/V re-reads scale as Lq/tq).
    if Lq > target_tq:
        tq = max(sublane, (target_tq // sublane) * sublane)
    else:
        tq = _round_up(Lq, sublane)
    num_q_tiles = _cdiv(Lq, tq)
    # Megacore: if B == 1 and there is only one q tile, split it so both
    # TensorCores (v7x) get a parallel program.
    if B == 1 and num_q_tiles == 1 and Lq > sublane:
        tq = _round_up(_cdiv(Lq, 2), sublane)
        num_q_tiles = _cdiv(Lq, tq)

    # kv tile: MXU-aligned (multiple of 256) when Lk is large.
    if Lk > target_tk:
        tk = max(256, (target_tk // 256) * 256)
    else:
        tk = _round_up(Lk, sublane)

    Bb = _pick_batch_block(B, num_q_tiles, tq)

    # --- Padding: lane-dense feature dims, tile-multiple sequence dims ------
    Dp = _round_up(D, 128)
    Dvp = _round_up(Dv, 128)
    Lq_p = _round_up(Lq, tq)
    Lk_p = _round_up(Lk, tk)
    kv_is_padded = Lk_p != Lk

    q_p = _pad_to(q, (B, Lq_p, Dp))
    k_p = _pad_to(k, (B, Lk_p, Dp))
    v_p = _pad_to(v, (B, Lk_p, Dvp))

    inv_temperature = 1.0 / float(temperature)
    kernel = functools.partial(
        _sdpa_flash_kernel,
        inv_temperature=inv_temperature,
        kv_len=Lk,
        block_k=tk,
        kv_is_padded=kv_is_padded,
    )

    # --- VMEM budget: generation-aware (75% of physical) --------------------
    try:
        vmem_phys = int(pltpu.get_tpu_info().vmem_capacity_bytes)
    except Exception:
        vmem_phys = 64 * 1024 * 1024
    vmem_cap = (vmem_phys * 3) // 4  # ~48 MiB on v7x, ~96 MiB on v5e/v6e

    tile_bytes = (Bb * tq * Dp + Bb * tk * Dp + Bb * tk * Dvp
                  + Bb * tq * Dvp) * itemsize
    scratch_bytes = Bb * tq * Dp * itemsize + Bb * tq * (Dvp + 2) * 4
    need = 2 * tile_bytes + scratch_bytes + (4 << 20)
    vmem_limit = min(vmem_cap, max(32 * 1024 * 1024, need))

    # --- Cost estimate (counts the K/V re-reads) -----------------------------
    gq = Lq_p // tq
    cost = pl.CostEstimate(
        flops=2 * B * Lq_p * Lk_p * (Dp + Dvp),
        transcendentals=B * Lq_p * Lk_p,
        bytes_accessed=(B * Lq_p * Dp                      # q (read once per tile)
                        + gq * B * Lk_p * (Dp + Dvp)       # k, v re-streamed per q tile
                        + B * Lq_p * Dvp) * itemsize,      # out
    )

    grid = (B // Bb, Lq_p // tq, Lk_p // tk)

    out = pl.pallas_call(
        kernel,
        out_shape=jax.ShapeDtypeStruct((B, Lq_p, Dvp), dtype),
        grid_spec=pltpu.PrefetchScalarGridSpec(
            num_scalar_prefetch=0,
            grid=grid,
            in_specs=[
                pl.BlockSpec((Bb, tq, Dp), lambda b, i, j: (b, i, 0)),
                pl.BlockSpec((Bb, tk, Dp), lambda b, i, j: (b, j, 0)),
                pl.BlockSpec((Bb, tk, Dvp), lambda b, i, j: (b, j, 0)),
            ],
            out_specs=pl.BlockSpec((Bb, tq, Dvp), lambda b, i, j: (b, i, 0)),
            scratch_shapes=[
                pltpu.VMEM((Bb, tq, Dp), dtype),         # pre-scaled q
                pltpu.VMEM((Bb, tq, 1), jnp.float32),    # running max m
                pltpu.VMEM((Bb, tq, 1), jnp.float32),    # running denom l
                pltpu.VMEM((Bb, tq, Dvp), jnp.float32),  # unnormalized acc
            ],
        ),
        compiler_params=pltpu.CompilerParams(
            dimension_semantics=("parallel", "parallel", "arbitrary"),
            vmem_limit_bytes=int(vmem_limit),
        ),
        cost_estimate=cost,
    )(q_p, k_p, v_p)

    # Strip padding (cheap XLA slice outside the kernel).
    if Lq_p != Lq or Dvp != Dv:
        out = out[:, :Lq, :Dv]
    return out


def _reference(q, k, v, temperature):
    scores = jnp.einsum("bqd,bkd->bqk", q, k) / temperature
    attn = jax.nn.softmax(scores, axis=2)
    return jnp.einsum("bqk,bkd->bqd", attn, v)


if __name__ == "__main__":
    B, Lq, Lk, D, Dv = 2, 8, 8, 32, 32
    temperature = float(jnp.sqrt(jnp.float32(D)))  # usual sqrt(d_k) scaling

    key = jax.random.PRNGKey(0)
    kq, kk, kv = jax.random.split(key, 3)
    q = jax.random.normal(kq, (B, Lq, D), dtype=jnp.float32)
    k = jax.random.normal(kk, (B, Lk, D), dtype=jnp.float32)
    v = jax.random.normal(kv, (B, Lk, Dv), dtype=jnp.float32)

    out = scaled_dot_product_attention(q, k, v, temperature)
    out = jax.block_until_ready(out)

    ref = _reference(q, k, v, temperature)
    assert out.shape == (B, Lq, Dv)
    assert jnp.allclose(out, ref, atol=2e-5, rtol=2e-5), (
        float(jnp.max(jnp.abs(out - ref))))

    print("KERNEL_OK")
</pallas_src>

<mosaic_0001>
module attributes {stable_mosaic.version = 11 : i64} {
  func.func @_sdpa_flash_kernel(%arg0: i32, %arg1: i32, %arg2: i32, %arg3: memref<1x8x128xf32, #tpu.memory_space<vmem>>, %arg4: memref<1x8x128xf32, #tpu.memory_space<vmem>>, %arg5: memref<1x8x128xf32, #tpu.memory_space<vmem>>, %arg6: memref<1x8x128xf32, #tpu.memory_space<vmem>>, %arg7: memref<1x8x128xf32, #tpu.memory_space<vmem>>, %arg8: memref<1x8x1xf32, #tpu.memory_space<vmem>>, %arg9: memref<1x8x1xf32, #tpu.memory_space<vmem>>, %arg10: memref<1x8x128xf32, #tpu.memory_space<vmem>>) attributes {dimension_semantics = [#tpu.dimension_semantics<parallel>, #tpu.dimension_semantics<parallel>, #tpu.dimension_semantics<arbitrary>], iteration_bounds = array<i64: 2, 1, 1>, scalar_prefetch = 0 : i64, scratch_operands = 4 : i64, tpu.core_type = #tpu.core_type<tc>, window_params = [{transform_indices = @transform_0, window_bounds = array<i64: 1, 8, 128>}, {transform_indices = @transform_1, window_bounds = array<i64: 1, 8, 128>}, {transform_indices = @transform_2, window_bounds = array<i64: 1, 8, 128>}, {transform_indices = @transform_3, window_bounds = array<i64: 1, 8, 128>}]} {
    %c0_i32 = arith.constant 0 : i32
    %0 = arith.cmpi eq, %arg2, %c0_i32 : i32
    %1 = arith.extui %0 : i1 to i32
    %c0_i32_0 = arith.constant 0 : i32
    %2 = arith.cmpi ne, %1, %c0_i32_0 : i32
    scf.if %2 {
      %c0_32 = arith.constant 0 : index
      %c0_33 = arith.constant 0 : index
      %c0_34 = arith.constant 0 : index
      %32 = vector.load %arg3[%c0_32, %c0_33, %c0_34] : memref<1x8x128xf32, #tpu.memory_space<vmem>>, vector<1x8x128xf32>
      %cst_35 = arith.constant 0.176776692 : f32
      %33 = vector.broadcast %cst_35 : f32 to vector<1x8x128xf32>
      %34 = arith.mulf %32, %33 : vector<1x8x128xf32>
      %c0_36 = arith.constant 0 : index
      %c0_37 = arith.constant 0 : index
      %c0_38 = arith.constant 0 : index
      %35 = vector.load %arg7[%c0_36, %c0_37, %c0_38] : memref<1x8x128xf32, #tpu.memory_space<vmem>>, vector<1x8x128xf32>
      tpu.vector_store %arg7[%c0_36, %c0_37, %c0_38], %34 {strides = array<i32>} : memref<1x8x128xf32, #tpu.memory_space<vmem>>, vector<1x8x128xf32>,
      %cst_39 = arith.constant 0xFF800000 : f32
      %36 = vector.broadcast %cst_39 : f32 to vector<1x8x1xf32>
      %c0_40 = arith.constant 0 : index
      %c0_41 = arith.constant 0 : index
      %c0_42 = arith.constant 0 : index
      %37 = vector.load %arg8[%c0_40, %c0_41, %c0_42] : memref<1x8x1xf32, #tpu.memory_space<vmem>>, vector<1x8x1xf32>
      tpu.vector_store %arg8[%c0_40, %c0_41, %c0_42], %36 {strides = array<i32>} : memref<1x8x1xf32, #tpu.memory_space<vmem>>, vector<1x8x1xf32>,
      %cst_43 = arith.constant 0.000000e+00 : f32
      %38 = vector.broadcast %cst_43 : f32 to vector<1x8x1xf32>
      %c0_44 = arith.constant 0 : index
      %c0_45 = arith.constant 0 : index
      %c0_46 = arith.constant 0 : index
      %39 = vector.load %arg9[%c0_44, %c0_45, %c0_46] : memref<1x8x1xf32, #tpu.memory_space<vmem>>, vector<1x8x1xf32>
      tpu.vector_store %arg9[%c0_44, %c0_45, %c0_46], %38 {strides = array<i32>} : memref<1x8x1xf32, #tpu.memory_space<vmem>>, vector<1x8x1xf32>,
      %cst_47 = arith.constant 0.000000e+00 : f32
      %40 = vector.broadcast %cst_47 : f32 to vector<1x8x128xf32>
      %c0_48 = arith.constant 0 : index
      %c0_49 = arith.constant 0 : index
      %c0_50 = arith.constant 0 : index
      %41 = vector.load %arg10[%c0_48, %c0_49, %c0_50] : memref<1x8x128xf32, #tpu.memory_space<vmem>>, vector<1x8x128xf32>
      tpu.vector_store %arg10[%c0_48, %c0_49, %c0_50], %40 {strides = array<i32>} : memref<1x8x128xf32, #tpu.memory_space<vmem>>, vector<1x8x128xf32>,
    } else {
    }
    %c0 = arith.constant 0 : index
    %c0_1 = arith.constant 0 : index
    %c0_2 = arith.constant 0 : index
    %3 = vector.load %arg7[%c0, %c0_1, %c0_2] : memref<1x8x128xf32, #tpu.memory_space<vmem>>, vector<1x8x128xf32>
    %c0_3 = arith.constant 0 : index
    %c0_4 = arith.constant 0 : index
    %c0_5 = arith.constant 0 : index
    %4 = vector.load %arg4[%c0_3, %c0_4, %c0_5] : memref<1x8x128xf32, #tpu.memory_space<vmem>>, vector<1x8x128xf32>
    %c0_6 = arith.constant 0 : index
    %c0_7 = arith.constant 0 : index
    %c0_8 = arith.constant 0 : index
    %5 = vector.load %arg5[%c0_6, %c0_7, %c0_8] : memref<1x8x128xf32, #tpu.memory_space<vmem>>, vector<1x8x128xf32>
    "tpu.trace_start"() <{level = 10 : i32, message = "bqd,bkd->bqk"}> : () -> ()
    %cst = arith.constant dense<0.000000e+00> : vector<1x8x8xf32>
    %6 = tpu.matmul %3, %4, %cst {dimension_numbers = #tpu.dot_dimension_numbers<[2], [2], [1], [1], [0, 0, 0, 1, 1, 1], [0], [0]>} : vector<1x8x128xf32>, vector<1x8x128xf32>, vector<1x8x8xf32> -> vector<1x8x8xf32>
    "tpu.trace_stop"() : () -> ()
    %c0_9 = arith.constant 0 : index
    %c0_10 = arith.constant 0 : index
    %c0_11 = arith.constant 0 : index
    %7 = vector.load %arg8[%c0_9, %c0_10, %c0_11] : memref<1x8x1xf32, #tpu.memory_space<vmem>>, vector<1x8x1xf32>
    %cst_12 = arith.constant dense<0xFF800000> : vector<1x8xf32>
    %8 = vector.multi_reduction <maximumf>, %6, %cst_12 [2] : vector<1x8x8xf32> to vector<1x8xf32>
    %9 = vector.shape_cast %8 : vector<1x8xf32> to vector<1x8x1xf32>
    %10 = arith.maximumf %7, %9 : vector<1x8x1xf32>
    %11 = arith.subf %7, %10 : vector<1x8x1xf32>
    %12 = math.exp %11 : vector<1x8x1xf32>
    %13 = vector.broadcast %10 : vector<1x8x1xf32> to vector<1x8x8xf32>
    %14 = arith.subf %6, %13 : vector<1x8x8xf32>
    %15 = math.exp %14 : vector<1x8x8xf32>
    %c0_13 = arith.constant 0 : index
    %c0_14 = arith.constant 0 : index
    %c0_15 = arith.constant 0 : index
    %16 = vector.load %arg9[%c0_13, %c0_14, %c0_15] : memref<1x8x1xf32, #tpu.memory_space<vmem>>, vector<1x8x1xf32>
    %17 = arith.mulf %12, %16 : vector<1x8x1xf32>
    %cst_16 = arith.constant dense<0.000000e+00> : vector<1x8xf32>
    %18 = vector.multi_reduction <add>, %15, %cst_16 [2] : vector<1x8x8xf32> to vector<1x8xf32>
    %19 = vector.shape_cast %18 : vector<1x8xf32> to vector<1x8x1xf32>
    %20 = arith.addf %17, %19 : vector<1x8x1xf32>
    %c0_17 = arith.constant 0 : index
    %c0_18 = arith.constant 0 : index
    %c0_19 = arith.constant 0 : index
    %21 = vector.load %arg9[%c0_17, %c0_18, %c0_19] : memref<1x8x1xf32, #tpu.memory_space<vmem>>, vector<1x8x1xf32>
    tpu.vector_store %arg9[%c0_17, %c0_18, %c0_19], %20 {strides = array<i32>} : memref<1x8x1xf32, #tpu.memory_space<vmem>>, vector<1x8x1xf32>,
    %c0_20 = arith.constant 0 : index
    %c0_21 = arith.constant 0 : index
    %c0_22 = arith.constant 0 : index
    %22 = vector.load %arg10[%c0_20, %c0_21, %c0_22] : memref<1x8x128xf32, #tpu.memory_space<vmem>>, vector<1x8x128xf32>
    %23 = vector.broadcast %12 : vector<1x8x1xf32> to vector<1x8x128xf32>
    %24 = arith.mulf %23, %22 : vector<1x8x128xf32>
    "tpu.trace_start"() <{level = 10 : i32, message = "bqk,bkd->bqd"}> : () -> ()
    %cst_23 = arith.constant dense<0.000000e+00> : vector<1x8x128xf32>
    %25 = tpu.matmul %15, %5, %cst_23 {dimension_numbers = #tpu.dot_dimension_numbers<[2], [1], [1], [2], [0, 0, 0, 1, 1, 2], [0], [0]>} : vector<1x8x8xf32>, vector<1x8x128xf32>, vector<1x8x128xf32> -> vector<1x8x128xf32>
    "tpu.trace_stop"() : () -> ()
    %26 = arith.addf %24, %25 : vector<1x8x128xf32>
    %c0_24 = arith.constant 0 : index
    %c0_25 = arith.constant 0 : index
    %c0_26 = arith.constant 0 : index
    %27 = vector.load %arg10[%c0_24, %c0_25, %c0_26] : memref<1x8x128xf32, #tpu.memory_space<vmem>>, vector<1x8x128xf32>
    tpu.vector_store %arg10[%c0_24, %c0_25, %c0_26], %26 {strides = array<i32>} : memref<1x8x128xf32, #tpu.memory_space<vmem>>, vector<1x8x128xf32>,
    %c0_27 = arith.constant 0 : index
    %c0_28 = arith.constant 0 : index
    %c0_29 = arith.constant 0 : index
    %28 = vector.load %arg8[%c0_27, %c0_28, %c0_29] : memref<1x8x1xf32, #tpu.memory_space<vmem>>, vector<1x8x1xf32>
    tpu.vector_store %arg8[%c0_27, %c0_28, %c0_29], %10 {strides = array<i32>} : memref<1x8x1xf32, #tpu.memory_space<vmem>>, vector<1x8x1xf32>,
    %c0_i32_30 = arith.constant 0 : i32
    %29 = arith.cmpi eq, %arg2, %c0_i32_30 : i32
    %30 = arith.extui %29 : i1 to i32
    %c0_i32_31 = arith.constant 0 : i32
    %31 = arith.cmpi ne, %30, %c0_i32_31 : i32
    scf.if %31 {
      %c0_32 = arith.constant 0 : index
      %c0_33 = arith.constant 0 : index
      %c0_34 = arith.constant 0 : index
      %32 = vector.load %arg9[%c0_32, %c0_33, %c0_34] : memref<1x8x1xf32, #tpu.memory_space<vmem>>, vector<1x8x1xf32>
      %33 = tpu.reciprocal %32 : vector<1x8x1xf32> -> vector<1x8x1xf32>
      %c0_35 = arith.constant 0 : index
      %c0_36 = arith.constant 0 : index
      %c0_37 = arith.constant 0 : index
      %34 = vector.load %arg10[%c0_35, %c0_36, %c0_37] : memref<1x8x128xf32, #tpu.memory_space<vmem>>, vector<1x8x128xf32>
      %35 = vector.broadcast %33 : vector<1x8x1xf32> to vector<1x8x128xf32>
      %36 = arith.mulf %34, %35 : vector<1x8x128xf32>
      %c0_38 = arith.constant 0 : index
      %c0_39 = arith.constant 0 : index
      %c0_40 = arith.constant 0 : index
      %37 = vector.load %arg6[%c0_38, %c0_39, %c0_40] : memref<1x8x128xf32, #tpu.memory_space<vmem>>, vector<1x8x128xf32>
      tpu.vector_store %arg6[%c0_38, %c0_39, %c0_40], %36 {strides = array<i32>} : memref<1x8x128xf32, #tpu.memory_space<vmem>>, vector<1x8x128xf32>,
    } else {
    }
    return
  }
  func.func @transform_0(%arg0: i32, %arg1: i32, %arg2: i32) -> (i32, i32, i32) {
    %c0_i32 = arith.constant 0 : i32
    %c0_i32_0 = arith.constant 0 : i32
    return %arg0, %arg1, %c0_i32 : i32, i32, i32
  }
  func.func @transform_1(%arg0: i32, %arg1: i32, %arg2: i32) -> (i32, i32, i32) {
    %c0_i32 = arith.constant 0 : i32
    %c0_i32_0 = arith.constant 0 : i32
    return %arg0, %arg2, %c0_i32 : i32, i32, i32
  }
  func.func @transform_2(%arg0: i32, %arg1: i32, %arg2: i32) -> (i32, i32, i32) {
    %c0_i32 = arith.constant 0 : i32
    %c0_i32_0 = arith.constant 0 : i32
    return %arg0, %arg2, %c0_i32 : i32, i32, i32
  }
  func.func @transform_3(%arg0: i32, %arg1: i32, %arg2: i32) -> (i32, i32, i32) {
    %c0_i32 = arith.constant 0 : i32
    %c0_i32_0 = arith.constant 0 : i32
    return %arg0, %arg1, %c0_i32 : i32, i32, i32
  }
}

</mosaic_0001>

<llo_original>
// kernel: tpu_custom_call.1
$region0: #{tpu_custom_call.1}
  #allocation0 [shape = 'u32[]', space=smem, size = 0x4, offset = 0x4, fixed_abs, tag = 'smem constant byte address 0x4 - core index']
  #allocation1 [shape = 'u32[144,128]{1,0:T(1,128)}', space=vmem, size = 0x12000, scoped, tag = 'internal scratch']
  #allocation2 [shape = 'f32[1,8,128]{2,1,0:T(8,128)}', space=vmem, size = 0x1000, scoped, tag = 'scratch operand']
  #allocation3 [shape = 'f32[1,8,1]{2,1,0:T(8,128)}', space=vmem, size = 0x1000, scoped, tag = 'scratch operand']
  #allocation4 [shape = 'f32[1,8,1]{2,1,0:T(8,128)}', space=vmem, size = 0x1000, scoped, tag = 'scratch operand']
  #allocation5 [shape = 'f32[1,8,128]{2,1,0:T(8,128)}', space=vmem, size = 0x1000, scoped, tag = 'scratch operand']
  %s0 = inlined_call_operand.hbm [shape: f32[2,8,128], index: 0, kind: input, shape index: {}]
  %s1 = inlined_call_operand.hbm [shape: f32[2,8,128], index: 1, kind: input, shape index: {}]
  %s2 = inlined_call_operand.hbm [shape: f32[2,8,128], index: 2, kind: input, shape index: {}]
  %s3 = inlined_call_operand.hbm [shape: f32[2,8,128], index: 3, kind: output, shape index: {}]
  %s4 = sld [smem:[#allocation0]]
  $region65: #{tpu_custom_call.1} parent=0
    _
  %s6 = ssub.s32 1, %s4
  %s7 = scalar_select 0, %s6, %s4
  $region1: #{tpu_custom_call.1} parent=0
    #allocation6 [shape = 'u8[8192]{0}', space=vmem, size = 0x2000, scoped, tag = 'input window, operand 0']
    #allocation7 [shape = 's32[2]{0}', space=sflag, size = 0x8, scoped, tag = 'scoped memory for tpu_custom_call.1']
    #allocation8 [shape = 's32[2]{0}', space=sflag, size = 0x8, scoped, tag = 'scoped memory for tpu_custom_call.1']
    #allocation9 [shape = 'u8[8192]{0}', space=vmem, size = 0x2000, scoped, tag = 'input window, operand 1']
    #allocation10 [shape = 's32[2]{0}', space=sflag, size = 0x8, scoped, tag = 'scoped memory for tpu_custom_call.1']
    #allocation11 [shape = 'u8[8192]{0}', space=vmem, size = 0x2000, scoped, tag = 'input window, operand 2']
    #allocation12 [shape = 'u8[8192]{0}', space=vmem, size = 0x2000, scoped, tag = 'output window, operand 0']
    %8 = vsyncpa [#allocation7], 0
    %s9 = scalar_lea.sflag [#allocation7], 1
    %10 = vsyncpa %s9, 0
    %11 = vsyncpa [#allocation10], 0
    %s12 = scalar_lea.sflag [#allocation10], 1
    %13 = vsyncpa %s12, 0
    %14 = vsyncpa [#allocation8], 0
    %s15 = scalar_lea.sflag [#allocation8], 1
    %16 = vsyncpa %s15, 0
    loop: start=0, step=1, limit=4
    $region2: #{tpu_custom_call.1} parent=1 // loop_pre_header
      _
    $region3: #{tpu_custom_call.1} parent=1 // loop_header
      %s18 = sphi 0, %s22
      %p19 = scmp.ge.s32.totalorder %s18, 4
      %s25 = sphi 0, %s44
      %s26 = sphi 0, %s40
      %s27 = sphi 0, %s36
      %s28 = sphi 0, %s25
      %s29 = sphi 0, %s26
      %s30 = sphi 0, %s27
      %s31 = sphi 0, %s28
      %s32 = sphi 0, %s29
      %s33 = sphi 0, %s30
      %s49 = sphi 0, %s51
      %s52 = sphi 0, %s49
      %s53 = sphi 0, %s52
      %s69 = sphi 0, %s53
      %s77 = sphi 0, %s79
      %s80 = sphi 0, %s77
      %s81 = sphi 0, %s80
      %s97 = sphi 0, %s81
      %s105 = sphi 0, %s107
      %s108 = sphi 0, %s105
      %s109 = sphi 0, %s108
      %s125 = sphi 0, %s109
      %s133 = sphi 0, %s135
      %s136 = sphi 0, %s133
      %s137 = sphi 0, %s136
      %s153 = sphi 0, %s137
    $region4: #{tpu_custom_call.1} parent=1 // loop_header_branch
      %21 = sbr.rel (%p19) target = $region8
    $region5: #{tpu_custom_call.1} parent=1 // loop_body
      %s23 = ssub.s32 %s18, 1
      %s24 = ssub.s32 %s18, 2
      %s34 = sadd.s32 1, %s27
      %p35 = scmp.ge.s32.totalorder %s34, 1
      %s36 = scalar_select %p35, 0, %s34
      %s37 = sadd.s32 1, %s26
      %s38 = scalar_select %p35, %s37, %s26
      %p39 = scmp.ge.s32.totalorder %s38, 1
      %s40 = scalar_select %p39, 0, %s38
      %s41 = sadd.s32 1, %s25
      %s42 = scalar_select %p39, %s41, %s25
      %p43 = scmp.ge.s32.totalorder %s42, 2
      %s44 = scalar_select %p43, 0, %s42
      %s45 = ssub.s32 %s25, %s44
      %s46 = ssub.s32 %s26, %s40
      %s47 = sor.u32 %s45, %s46
      %p48 = scmp.eq.s32.totalorder %s47, 0
      %s50 = sadd.s32 %s49, 1
      %s51 = scalar_select %p48, %s49, %s50
      %p54 = pneg %p48
      %p55 = scmp.eq.s32.totalorder %s18, 1
      %p56 = por %p54, %p55
      %p57 = scmp.ne.s32.totalorder %s49, %s52
      %p58 = scmp.eq.s32.totalorder %s18, 0
      %p59 = por %p57, %p58
      %p60 = scmp.ne.s32.totalorder %s49, %s52
      %p61 = scmp.eq.s32.totalorder %s23, 1
      %p62 = por %p60, %p61
      %p63 = scmp.ne.s32.totalorder %s52, %s53
      %p64 = scmp.eq.s32.totalorder %s23, 0
      %p65 = por %p63, %p64
      %p66 = scmp.ne.s32.totalorder %s52, %s53
      %p67 = scmp.eq.s32.totalorder %s24, 1
      %p68 = por %p66, %p67
      %p70 = scmp.ne.s32.totalorder %s53, %s69
      %p71 = scmp.eq.s32.totalorder %s24, 0
      %p72 = por %p70, %p71
      %s73 = ssub.s32 %s25, %s44
      %s74 = ssub.s32 %s27, %s36
      %s75 = sor.u32 %s73, %s74
      %p76 = scmp.eq.s32.totalorder %s75, 0
      %s78 = sadd.s32 %s77, 1
      %s79 = scalar_select %p76, %s77, %s78
      %p82 = pneg %p76
      %p83 = scmp.eq.s32.totalorder %s18, 1
      %p84 = por %p82, %p83
      %p85 = scmp.ne.s32.totalorder %s77, %s80
      %p86 = scmp.eq.s32.totalorder %s18, 0
      %p87 = por %p85, %p86
      %p88 = scmp.ne.s32.totalorder %s77, %s80
      %p89 = scmp.eq.s32.totalorder %s23, 1
      %p90 = por %p88, %p89
      %p91 = scmp.ne.s32.totalorder %s80, %s81
      %p92 = scmp.eq.s32.totalorder %s23, 0
      %p93 = por %p91, %p92
      %p94 = scmp.ne.s32.totalorder %s80, %s81
      %p95 = scmp.eq.s32.totalorder %s24, 1
      %p96 = por %p94, %p95
      %p98 = scmp.ne.s32.totalorder %s81, %s97
      %p99 = scmp.eq.s32.totalorder %s24, 0
      %p100 = por %p98, %p99
      %s101 = ssub.s32 %s25, %s44
      %s102 = ssub.s32 %s27, %s36
      %s103 = sor.u32 %s101, %s102
      %p104 = scmp.eq.s32.totalorder %s103, 0
      %s106 = sadd.s32 %s105, 1
      %s107 = scalar_select %p104, %s105, %s106
      %p110 = pneg %p104
      %p111 = scmp.eq.s32.totalorder %s18, 1
      %p112 = por %p110, %p111
      %p113 = scmp.ne.s32.totalorder %s105, %s108
      %p114 = scmp.eq.s32.totalorder %s18, 0
      %p115 = por %p113, %p114
      %p116 = scmp.ne.s32.totalorder %s105, %s108
      %p117 = scmp.eq.s32.totalorder %s23, 1
      %p118 = por %p116, %p117
      %p119 = scmp.ne.s32.totalorder %s108, %s109
      %p120 = scmp.eq.s32.totalorder %s23, 0
      %p121 = por %p119, %p120
      %p122 = scmp.ne.s32.totalorder %s108, %s109
      %p123 = scmp.eq.s32.totalorder %s24, 1
      %p124 = por %p122, %p123
      %p126 = scmp.ne.s32.totalorder %s109, %s125
      %p127 = scmp.eq.s32.totalorder %s24, 0
      %p128 = por %p126, %p127
      %s129 = ssub.s32 %s25, %s44
      %s130 = ssub.s32 %s26, %s40
      %s131 = sor.u32 %s129, %s130
      %p132 = scmp.eq.s32.totalorder %s131, 0
      %s134 = sadd.s32 %s133, 1
      %s135 = scalar_select %p132, %s133, %s134
      %p138 = pneg %p132
      %p139 = scmp.eq.s32.totalorder %s18, 1
      %p140 = por %p138, %p139
      %p141 = scmp.ne.s32.totalorder %s133, %s136
      %p142 = scmp.eq.s32.totalorder %s18, 0
      %p143 = por %p141, %p142
      %p144 = scmp.ne.s32.totalorder %s133, %s136
      %p145 = scmp.eq.s32.totalorder %s23, 1
      %p146 = por %p144, %p145
      %p147 = scmp.ne.s32.totalorder %s136, %s137
      %p148 = scmp.eq.s32.totalorder %s23, 0
      %p149 = por %p147, %p148
      %p150 = scmp.ne.s32.totalorder %s136, %s137
      %p151 = scmp.eq.s32.totalorder %s24, 1
      %p152 = por %p150, %p151
      %p154 = scmp.ne.s32.totalorder %s137, %s153
      %p155 = scmp.eq.s32.totalorder %s24, 0
      %p156 = por %p154, %p155
      %p157 = scmp.le.s32.totalorder 1, %s18
      %p158 = scmp.lt.s32.totalorder %s18, 3
      %p159 = pnand %p157, %p158
      %p160 = pneg %p159
      // Predicated region
      $region9: #{tpu_custom_call.1} parent=5 // pred_check
        _
      $region10: #{tpu_custom_call.1} parent=5 // pred_check_branch
        %162 = sbr.rel (%p159) target = $region12
      $region11: #{tpu_custom_call.1} parent=5 // pred_region
        %s163 = ssub.s32 %s18, 1
      $region12: #{tpu_custom_call.1} parent=5 // pred_fallthru
        _
      %p164 = scmp.lt.s32.totalorder %s18, 2
      // Predicated region
      $region13: #{tpu_custom_call.1} parent=5 // pred_check
        %p165 = pneg %p164
      $region14: #{tpu_custom_call.1} parent=5 // pred_check_branch
        %167 = sbr.rel (%p165) target = $region16
      $region15: #{tpu_custom_call.1} parent=5 // pred_region
        // Predicated region
        $region17: #{tpu_custom_call.1} parent=15 // pred_check
          %p168 = pneg %p59
        $region18: #{tpu_custom_call.1} parent=15 // pred_check_branch
          %170 = sbr.rel (%p168) target = $region20
        $region19: #{tpu_custom_call.1} parent=15 // pred_region
          %s171 = sand.u32 %s49, 1
          %s172 = scalar_lea.sflag [#allocation7], %s171
          %s173 = sand.u32 %s49, 1
          %s174 = smul.addr %s173, 8
          %s175 = scalar_lea.vmem [#allocation6], %s174
          %s177 = ssub.s32 128, 128
          %178 = vsyncadd %s172, %s177
          %s179 = sadd.s32 %s26, %s25
          %s180 = smul.addr %s179, 128
          %s181 = scalar_lea.hbm %s0, %s180
          %s183 = sshll.u32 %s175, 4
          %s184 = int_to_ptr.vmem [resolvable:$true] %s183
          %186 = dma.hbm_to_vmem [thread:$0]  %s181, 128, %s184, %s172
        $region20: #{tpu_custom_call.1} parent=15 // pred_fallthru
          _
        // Predicated region
        $region21: #{tpu_custom_call.1} parent=15 // pred_check
          %p187 = pneg %p87
        $region22: #{tpu_custom_call.1} parent=15 // pred_check_branch
          %189 = sbr.rel (%p187) target = $region24
        $region23: #{tpu_custom_call.1} parent=15 // pred_region
          %s190 = sand.u32 %s18, 1
          %s191 = scalar_lea.sflag [#allocation10], %s190
          %s192 = sand.u32 %s77, 1
          %s193 = smul.addr %s192, 8
          %s194 = scalar_lea.vmem [#allocation9], %s193
          %s196 = ssub.s32 128, 128
          %197 = vsyncadd %s191, %s196
          %s198 = sadd.s32 %s27, %s25
          %s199 = smul.addr %s198, 128
          %s200 = scalar_lea.hbm %s1, %s199
          %s202 = sshll.u32 %s194, 4
          %s203 = int_to_ptr.vmem [resolvable:$true] %s202
          %205 = dma.hbm_to_vmem [thread:$0]  %s200, 128, %s203, %s191
        $region24: #{tpu_custom_call.1} parent=15 // pred_fallthru
          _
        // Predicated region
        $region25: #{tpu_custom_call.1} parent=15 // pred_check
          %p206 = pneg %p115
        $region26: #{tpu_custom_call.1} parent=15 // pred_check_branch
          %208 = sbr.rel (%p206) target = $region28
        $region27: #{tpu_custom_call.1} parent=15 // pred_region
          %s209 = sand.u32 %s18, 1
          %s210 = scalar_lea.sflag [#allocation10], %s209
          %s211 = sand.u32 %s105, 1
          %s212 = smul.addr %s211, 8
          %s213 = scalar_lea.vmem [#allocation11], %s212
          %s215 = ssub.s32 128, 128
          %216 = vsyncadd %s210, %s215
          %s217 = sadd.s32 %s27, %s25
          %s218 = smul.addr %s217, 128
          %s219 = scalar_lea.hbm %s2, %s218
          %s221 = sshll.u32 %s213, 4
          %s222 = int_to_ptr.vmem [resolvable:$true] %s221
          %224 = dma.hbm_to_vmem [thread:$0]  %s219, 128, %s222, %s210
        $region28: #{tpu_custom_call.1} parent=15 // pred_fallthru
          _
      $region16: #{tpu_custom_call.1} parent=5 // pred_fallthru
        _
      %p225 = scmp.le.s32.totalorder 1, %s18
      %p226 = scmp.lt.s32.totalorder %s18, 3
      %p227 = pnand %p225, %p226
      %p228 = pneg %p227
      // Predicated region
      $region29: #{tpu_custom_call.1} parent=5 // pred_check
        _
      $region30: #{tpu_custom_call.1} parent=5 // pred_check_branch
        %230 = sbr.rel (%p227) target = $region32
      $region31: #{tpu_custom_call.1} parent=5 // pred_region
        %s231 = ssub.s32 %s18, 1
        %s232 = sand.u32 %s52, 1
        %s233 = scalar_lea.sflag [#allocation7], %s232
        %s234 = sand.u32 %s52, 1
        %s235 = smul.addr %s234, 8
        %s236 = scalar_lea.vmem [#allocation6], %s235
        // Predicated region
        $region33: #{tpu_custom_call.1} parent=31 // pred_check
          %p237 = pneg %p65
        $region34: #{tpu_custom_call.1} parent=31 // pred_check_branch
          %239 = sbr.rel (%p237) target = $region36
        $region35: #{tpu_custom_call.1} parent=31 // pred_region
          %240 = dma.done %s233, 128
        $region36: #{tpu_custom_call.1} parent=31 // pred_fallthru
          _
        %s241 = sand.u32 %s23, 1
        %s242 = scalar_lea.sflag [#allocation10], %s241
        %s243 = sand.u32 %s80, 1
        %s244 = smul.addr %s243, 8
        %s245 = scalar_lea.vmem [#allocation9], %s244
        // Predicated region
        $region37: #{tpu_custom_call.1} parent=31 // pred_check
          %p246 = pneg %p93
        $region38: #{tpu_custom_call.1} parent=31 // pred_check_branch
          %248 = sbr.rel (%p246) target = $region40
        $region39: #{tpu_custom_call.1} parent=31 // pred_region
          %249 = dma.done %s242, 128
        $region40: #{tpu_custom_call.1} parent=31 // pred_fallthru
          _
        %s250 = sand.u32 %s23, 1
        %s251 = scalar_lea.sflag [#allocation10], %s250
        %s252 = sand.u32 %s108, 1
        %s253 = smul.addr %s252, 8
        %s254 = scalar_lea.vmem [#allocation11], %s253
        // Predicated region
        $region41: #{tpu_custom_call.1} parent=31 // pred_check
          %p255 = pneg %p121
        $region42: #{tpu_custom_call.1} parent=31 // pred_check_branch
          %257 = sbr.rel (%p255) target = $region44
        $region43: #{tpu_custom_call.1} parent=31 // pred_region
          %258 = dma.done %s251, 128
        $region44: #{tpu_custom_call.1} parent=31 // pred_fallthru
          _
        %s259 = sand.u32 %s52, 1
        %s260 = scalar_lea.sflag [#allocation7], %s259
        %s261 = sand.u32 %s52, 1
        %s262 = smul.addr %s261, 8
        %s263 = scalar_lea.vmem [#allocation6], %s262
        %p264 = pneg %p65
        %p265 = pneg %p62
        %s266 = sand.u32 %s23, 1
        %s267 = scalar_lea.sflag [#allocation10], %s266
        %s268 = sand.u32 %s80, 1
        %s269 = smul.addr %s268, 8
        %s270 = scalar_lea.vmem [#allocation9], %s269
        %p271 = pneg %p93
        %p272 = pneg %p90
        %s273 = sand.u32 %s23, 1
        %s274 = scalar_lea.sflag [#allocation10], %s273
        %s275 = sand.u32 %s108, 1
        %s276 = smul.addr %s275, 8
        %s277 = scalar_lea.vmem [#allocation11], %s276
        %p278 = pneg %p121
        %p279 = pneg %p118
        %p280 = pneg %p149
        %p281 = pneg %p146
        %s282 = sand.u32 %s136, 1
        %s283 = scalar_lea.sflag [#allocation8], %s282
        %s284 = sand.u32 %s136, 1
        %s285 = smul.addr %s284, 8
        %s286 = scalar_lea.vmem [#allocation12], %s285
        %p287 = scmp.eq.s32.totalorder %s30, 0
        // Predicated region
        $region45: #{tpu_custom_call.1} parent=31 // pred_check
          %p288 = pneg %p287
        $region46: #{tpu_custom_call.1} parent=31 // pred_check_branch
          %290 = sbr.rel (%p288) target = $region48
        $region47: #{tpu_custom_call.1} parent=31 // pred_region
          %v291 = vld [vmem:[%s236] sm:$0xff]
          %v292 = vmul.f32 %v291, 0.17677669
          %293 = vst [vmem:[#allocation2] sm:$0xff] %v292
          %vm294 = vcmask 7168
          %295 = vst.msk [vmem:[#allocation3] sm:$0xff] %vm294, -inf
          %296 = vst.msk [vmem:[#allocation4] sm:$0xff] %vm294, 0.0
          %297 = vst [vmem:[#allocation5] sm:$0xff] 0.0
        $region48: #{tpu_custom_call.1} parent=31 // pred_fallthru
          _
        %v298 = vld [vmem:[#allocation2] sm:$0xff]
        %v299 = vld [vmem:[%s245] sm:$0xff]
        %v300 = vld [vmem:[%s254] sm:$0xff]
        %301 = vmatprep.subr.mxu0 0.0
        %302 = vmatpush1.xpose.msra.mxu0 %v299
        %303 = vmatprep.subr.mxu0 0.0
        %304 = vmatpush1.xpose.msra.mxu0 0.0
        %305 = vmatprep.subr.mxu0 0.0
        %306 = vmatpush1.xpose.msra.mxu0 0.0
        %307 = vmatprep.subr.mxu0 0.0
        %308 = vmatpush1.xpose.msra.mxu0 0.0
        %309 = vmatprep.subr.mxu0 0.0
        %310 = vmatpush1.xpose.msra.mxu0 0.0
        %311 = vmatprep.subr.mxu0 0.0
        %312 = vmatpush1.xpose.msra.mxu0 0.0
        %313 = vmatprep.subr.mxu0 0.0
        %314 = vmatpush1.xpose.msra.mxu0 0.0
        %315 = vmatprep.subr.mxu0 0.0
        %316 = vmatpush1.xpose.msra.mxu0 0.0
        %317 = vmatprep.subr.mxu0 0.0
        %318 = vmatpush1.xpose.msra.mxu0 0.0
        %319 = vmatprep.subr.mxu0 0.0
        %320 = vmatpush1.xpose.msra.mxu0 0.0
        %321 = vmatprep.subr.mxu0 0.0
        %322 = vmatpush1.xpose.msra.mxu0 0.0
        %323 = vmatprep.subr.mxu0 0.0
        %324 = vmatpush1.xpose.msra.mxu0 0.0
        %325 = vmatprep.subr.mxu0 0.0
        %326 = vmatpush1.xpose.msra.mxu0 0.0
        %327 = vmatprep.subr.mxu0 0.0
        %328 = vmatpush1.xpose.msra.mxu0 0.0
        %329 = vmatprep.subr.mxu0 0.0
        %330 = vmatpush1.xpose.msra.mxu0 0.0
        %331 = vmatprep.subr.mxu0 0.0
        %332 = vmatpush1.xpose.msra.mxu0 0.0
        %333 = vmatprep.subr.mxu0 0.0
        %334 = vmatpush1.xpose.msra.mxu0 0.0
        %335 = vmatprep.subr.mxu0 0.0
        %336 = vmatpush1.xpose.msra.mxu0 0.0
        %337 = vmatprep.subr.mxu0 0.0
        %338 = vmatpush1.xpose.msra.mxu0 0.0
        %339 = vmatprep.subr.mxu0 0.0
        %340 = vmatpush1.xpose.msra.mxu0 0.0
        %341 = vmatprep.subr.mxu0 0.0
        %342 = vmatpush1.xpose.msra.mxu0 0.0
        %343 = vmatprep.subr.mxu0 0.0
        %344 = vmatpush1.xpose.msra.mxu0 0.0
        %345 = vmatprep.subr.mxu0 0.0
        %346 = vmatpush1.xpose.msra.mxu0 0.0
        %347 = vmatprep.subr.mxu0 0.0
        %348 = vmatpush1.xpose.msra.mxu0 0.0
        %349 = vmatprep.subr.mxu0 0.0
        %350 = vmatpush1.xpose.msra.mxu0 0.0
        %351 = vmatprep.subr.mxu0 0.0
        %352 = vmatpush1.xpose.msra.mxu0 0.0
        %353 = vmatprep.subr.mxu0 0.0
        %354 = vmatpush1.xpose.msra.mxu0 0.0
        %355 = vmatprep.subr.mxu0 0.0
        %356 = vmatpush1.xpose.msra.mxu0 0.0
        %357 = vmatprep.subr.mxu0 0.0
        %358 = vmatpush1.xpose.msra.mxu0 0.0
        %359 = vmatprep.subr.mxu0 0.0
        %360 = vmatpush1.xpose.msra.mxu0 0.0
        %361 = vmatprep.subr.mxu0 0.0
        %362 = vmatpush1.xpose.msra.mxu0 0.0
        %363 = vmatprep.subr.mxu0 0.0
        %364 = vmatpush1.xpose.msra.mxu0 0.0
        %365 = vmatprep.mubr.f32.mxu0 0.0
        %366 = vmatmul.mubr.f32.gmra.mrb[0].mxu0 %v298
        %v367 = vpop.f32.mrb[0].mxu0
        %v368 = vadd.f32 0.0, %v367
        %v369 = vpop.f32.mrb[0].mxu0
        %370 = vdwg.mxu0
        %v371 = vld [vmem:[#allocation3] sm:$0xff]
        %vm372 = vcmask 64512
        %v373 = vsel %vm372, %v368, -inf
        %374 = vmax.xlane.f32.xlu0 %v373
        %v375 = vpop.xlane.xlu0 %374
        %v376 = vmax.f32 %v371, %v375
        %v377 = vsub.f32 %v371, %v376
        %v378 = vmul.f32 %v377, 1.442695
        %v379 = vpow.pop %v378
        %381 = vset.pattern.permute.xlu0 0
        %382 = vperm.xlu0 %381, %v376
        %v383 = vpop.permute.xlu0 %382
        %v385 = vsub.f32 %v368, %v383
        %v386 = vmul.f32 %v385, 1.442695
        %v387 = vpow.pop %v386
        %v388 = vld [vmem:[#allocation4] sm:$0xff]
        %v389 = vmul.f32 %v379, %v388
        %v390 = vsel %vm372, %v387, 0.0
        %391 = vadd.xlane.f32.xlu0 %v390
        %v392 = vpop.xlane.xlu0 %391
        %v393 = vadd.f32 %v389, %v392
        %vm394 = vcmask 7168
        %395 = vst.msk [vmem:[#allocation4] sm:$0xff] %vm394, %v393
        %v396 = vld [vmem:[#allocation5] sm:$0xff]
        %398 = vset.pattern.permute.xlu0 0
        %399 = vperm.xlu0 %398, %v379
        %v400 = vpop.permute.xlu0 %399
        %v402 = vmul.f32 %v400, %v396
        %v404 = vsel %vm372, %v387, 0
        %406 = vmatprep.subr.mxu0 0.0
        %407 = vmatpush1.msra.mxu0 %v300
        %408 = vmatprep.subr.mxu0 0.0
        %409 = vmatpush1.msra.mxu0 0.0
        %410 = vmatprep.subr.mxu0 0.0
        %411 = vmatpush1.msra.mxu0 0.0
        %412 = vmatprep.subr.mxu0 0.0
        %413 = vmatpush1.msra.mxu0 0.0
        %414 = vmatprep.subr.mxu0 0.0
        %415 = vmatpush1.msra.mxu0 0.0
        %416 = vmatprep.subr.mxu0 0.0
        %417 = vmatpush1.msra.mxu0 0.0
        %418 = vmatprep.subr.mxu0 0.0
        %419 = vmatpush1.msra.mxu0 0.0
        %420 = vmatprep.subr.mxu0 0.0
        %421 = vmatpush1.msra.mxu0 0.0
        %422 = vmatprep.subr.mxu0 0.0
        %423 = vmatpush1.msra.mxu0 0.0
        %424 = vmatprep.subr.mxu0 0.0
        %425 = vmatpush1.msra.mxu0 0.0
        %426 = vmatprep.subr.mxu0 0.0
        %427 = vmatpush1.msra.mxu0 0.0
        %428 = vmatprep.subr.mxu0 0.0
        %429 = vmatpush1.msra.mxu0 0.0
        %430 = vmatprep.subr.mxu0 0.0
        %431 = vmatpush1.msra.mxu0 0.0
        %432 = vmatprep.subr.mxu0 0.0
        %433 = vmatpush1.msra.mxu0 0.0
        %434 = vmatprep.subr.mxu0 0.0
        %435 = vmatpush1.msra.mxu0 0.0
        %436 = vmatprep.subr.mxu0 0.0
        %437 = vmatpush1.msra.mxu0 0.0
        %438 = vmatprep.subr.mxu0 0.0
        %439 = vmatpush1.msra.mxu0 0.0
        %440 = vmatprep.subr.mxu0 0.0
        %441 = vmatpush1.msra.mxu0 0.0
        %442 = vmatprep.subr.mxu0 0.0
        %443 = vmatpush1.msra.mxu0 0.0
        %444 = vmatprep.subr.mxu0 0.0
        %445 = vmatpush1.msra.mxu0 0.0
        %446 = vmatprep.subr.mxu0 0.0
        %447 = vmatpush1.msra.mxu0 0.0
        %448 = vmatprep.subr.mxu0 0.0
        %449 = vmatpush1.msra.mxu0 0.0
        %450 = vmatprep.subr.mxu0 0.0
        %451 = vmatpush1.msra.mxu0 0.0
        %452 = vmatprep.subr.mxu0 0.0
        %453 = vmatpush1.msra.mxu0 0.0
        %454 = vmatprep.subr.mxu0 0.0
        %455 = vmatpush1.msra.mxu0 0.0
        %456 = vmatprep.subr.mxu0 0.0
        %457 = vmatpush1.msra.mxu0 0.0
        %458 = vmatprep.subr.mxu0 0.0
        %459 = vmatpush1.msra.mxu0 0.0
        %460 = vmatprep.subr.mxu0 0.0
        %461 = vmatpush1.msra.mxu0 0.0
        %462 = vmatprep.subr.mxu0 0.0
        %463 = vmatpush1.msra.mxu0 0.0
        %464 = vmatprep.subr.mxu0 0.0
        %465 = vmatpush1.msra.mxu0 0.0
        %466 = vmatprep.subr.mxu0 0.0
        %467 = vmatpush1.msra.mxu0 0.0
        %468 = vmatprep.subr.mxu0 0.0
        %469 = vmatpush1.msra.mxu0 0.0
        %470 = vmatprep.mubr.f32.mxu0 0.0
        %471 = vmatmul.mubr.f32.gmra.mrb[0].mxu0 %v404
        %v472 = vpop.f32.mrb[0].mxu0
        %v473 = vadd.f32 0.0, %v472
        %v474 = vpop.f32.mrb[0].mxu0
        %475 = vdwg.mxu0
        %v476 = vadd.f32 %v402, %v473
        %477 = vst [vmem:[#allocation5] sm:$0xff] %v476
        %478 = vst.msk [vmem:[#allocation3] sm:$0xff] %vm394, %v376
        // Predicated region
        $region49: #{tpu_custom_call.1} parent=31 // pred_check
          %p479 = pneg %p287
        $region50: #{tpu_custom_call.1} parent=31 // pred_check_branch
          %481 = sbr.rel (%p479) target = $region52
        $region51: #{tpu_custom_call.1} parent=31 // pred_region
          %v482 = vld [vmem:[#allocation4] sm:$0xff]
          %v483 = vrcp.pop %v482
          %v484 = vld [vmem:[#allocation5] sm:$0xff]
          %486 = vset.pattern.permute.xlu0 0
          %487 = vperm.xlu0 %486, %v483
          %v488 = vpop.permute.xlu0 %487
          %v490 = vmul.f32 %v484, %v488
          %491 = vst [vmem:[%s286] sm:$0xff] %v490
        $region52: #{tpu_custom_call.1} parent=31 // pred_fallthru
          _
        %s492 = sand.u32 %s136, 1
        %s493 = scalar_lea.sflag [#allocation8], %s492
        %s494 = sand.u32 %s136, 1
        %s495 = smul.addr %s494, 8
        %s496 = scalar_lea.vmem [#allocation12], %s495
        // Predicated region
        $region53: #{tpu_custom_call.1} parent=31 // pred_check
          %p497 = pneg %p146
        $region54: #{tpu_custom_call.1} parent=31 // pred_check_branch
          %499 = sbr.rel (%p497) target = $region56
        $region55: #{tpu_custom_call.1} parent=31 // pred_region
          %s501 = ssub.s32 128, 128
          %502 = vsyncadd %s493, %s501
          %s503 = sadd.s32 %s29, %s28
          %s504 = smul.addr %s503, 128
          %s505 = scalar_lea.hbm %s3, %s504
          %s507 = sshll.u32 %s496, 4
          %s508 = int_to_ptr.vmem [resolvable:$true] %s507
          %510 = dma.vmem_to_hbm [thread:$0]  %s508, 128, %s505, %s493
        $region56: #{tpu_custom_call.1} parent=31 // pred_fallthru
          _
      $region32: #{tpu_custom_call.1} parent=5 // pred_fallthru
        _
      %p511 = scmp.le.s32.totalorder 2, %s18
      // Predicated region
      $region57: #{tpu_custom_call.1} parent=5 // pred_check
        %p512 = pneg %p511
      $region58: #{tpu_custom_call.1} parent=5 // pred_check_branch
        %514 = sbr.rel (%p512) target = $region60
      $region59: #{tpu_custom_call.1} parent=5 // pred_region
        %s515 = ssub.s32 %s18, 2
        // Predicated region
        $region61: #{tpu_custom_call.1} parent=59 // pred_check
          %p516 = pneg %p152
        $region62: #{tpu_custom_call.1} parent=59 // pred_check_branch
          %518 = sbr.rel (%p516) target = $region64
        $region63: #{tpu_custom_call.1} parent=59 // pred_region
          %s519 = sand.u32 %s137, 1
          %s520 = scalar_lea.sflag [#allocation8], %s519
          %s521 = sand.u32 %s137, 1
          %s522 = smul.addr %s521, 8
          %s523 = scalar_lea.vmem [#allocation12], %s522
          %524 = dma.done %s520, 128
        $region64: #{tpu_custom_call.1} parent=59 // pred_fallthru
          _
      $region60: #{tpu_custom_call.1} parent=5 // pred_fallthru
        _
    $region6: #{tpu_custom_call.1} parent=1 // loop_footer
      %s22 = sadd.s32 1, %s18
    $region7: #{tpu_custom_call.1} parent=1 // loop_footer_branch
      %17 = sbr.rel target = $region3
    $region8: #{tpu_custom_call.1} parent=1 // loop_exit
      _
    %525 = vsyncpa [#allocation7], 1
    %s526 = scalar_lea.sflag [#allocation7], 1
    %527 = vsyncpa %s526, 1
    %528 = vsyncpa [#allocation10], 1
    %s529 = scalar_lea.sflag [#allocation10], 1
    %530 = vsyncpa %s529, 1
    %531 = vsyncpa [#allocation8], 1
    %s532 = scalar_lea.sflag [#allocation8], 1
    %533 = vsyncpa %s532, 1

</llo_original>
